<compile_context>
chip_gen: v7x
topology: tpu7x:2x2x1
jax: 0.10.0
libtpu: 0.0.40
codegen_flags: <defaults>
</compile_context>

<pallas_src>
import functools

import jax
import jax.numpy as jnp
from jax.experimental import pallas as pl
from jax.experimental.pallas import tpu as pltpu


# ---------------------------------------------------------------------------
# hardware-derived budgets
# ---------------------------------------------------------------------------

def _vmem_capacity_bytes():
    try:
        info = pltpu.get_tpu_info()
        cap = getattr(info, "vmem_capacity_bytes", None)
        if cap:
            return int(cap)
    except Exception:
        pass
    return 64 * 1024 * 1024  # conservative (v7x-sized) fallback


def _vmem_limit_bytes(cap):
    # ~65% of physical VMEM, capped; leaves headroom for compiler scratch.
    return int(max(32 * 1024 * 1024, min(int(cap * 0.65), 100 * 1024 * 1024)))


# ---------------------------------------------------------------------------
# helpers
# ---------------------------------------------------------------------------

def _layernorm(z, g, b, eps=1e-5):
    mu = jnp.mean(z, axis=-1, keepdims=True)
    var = jnp.mean((z - mu) ** 2, axis=-1, keepdims=True)
    return (z - mu) * jax.lax.rsqrt(var + eps) * g + b


def _pick_kv_tile(T, cap):
    if T <= cap:
        return T
    for t in (1024, 512, 256, 128, 64, 32, 16, 8):
        if t <= cap and T % t == 0:
            return t
    return T


def _pick_seq_block(NB, T, budget_tokens):
    # Batch several sequences per grid step to amortize per-step overhead, but
    # prefer >= 2 steps on the parallel axis (dual-TC chips shard that axis).
    divs = [d for d in range(1, NB + 1) if NB % d == 0]
    fit = [d for d in divs if d * T <= max(budget_tokens, T)] or [1]
    two_step = [d for d in fit if NB // d >= 2]
    return max(two_step) if two_step else max(fit)


def _pick_tq(T, cap):
    # Token-tile for temporal fusion; keep >= 2 grid steps when possible.
    limit = min(cap, T)
    if T >= 16:
        limit = min(limit, T // 2)
    t = limit - (limit % 8)
    while t >= 8:
        if T % t == 0:
            return t
        t -= 8
    return T


# ---------------------------------------------------------------------------
# lane-dense packed linear kernels (embed + fused upsample/out projections)
# ---------------------------------------------------------------------------

def _linear_kernel(x_ref, w_ref, b_ref, o_ref):
    o_ref[...] = (
        jnp.dot(x_ref[...].astype(jnp.bfloat16), w_ref[...],
                preferred_element_type=jnp.float32)
        + b_ref[...]
    ).astype(o_ref.dtype)


def _linear_res_kernel(x_ref, w_ref, b_ref, r_ref, o_ref):
    o_ref[...] = (
        jnp.dot(x_ref[...].astype(jnp.bfloat16), w_ref[...],
                preferred_element_type=jnp.float32)
        + b_ref[...]
        + r_ref[...].astype(jnp.float32)
    ).astype(o_ref.dtype)


def packed_linear(x, w, b, res=None, *, out_dtype=jnp.float32, block_m=1024):
    """y = x @ w + b (+ res), with `pack` tokens folded per row (block-diagonal
    weight) so the stored last dim is a multiple of 128 lanes."""
    M, K = x.shape
    N = w.shape[1]
    pack = 1
    for cand in (2, 4, 8, 16):
        if M % cand == 0 and (cand * N) % 128 == 0:
            pack = cand
            break
    Mp, Kp, Np = M // pack, K * pack, N * pack

    if pack > 1:
        eye = jnp.eye(pack, dtype=w.dtype)
        wp = (eye[:, None, :, None] * w[None, :, None, :]).reshape(Kp, Np)
        bp = jnp.tile(b.reshape(1, N), (1, pack))
    else:
        wp, bp = w, b.reshape(1, N)
    xp = x.reshape(Mp, Kp)

    bm = Mp
    if Mp > block_m:
        for t in (block_m, 1024, 512, 256, 128, 64, 32, 16, 8):
            if t <= block_m and Mp % t == 0:
                bm = t
                break

    bytes_accessed = (xp.size * xp.dtype.itemsize
                      + wp.size * wp.dtype.itemsize
                      + Np * 4
                      + Mp * Np * jnp.dtype(out_dtype).itemsize
                      + (0 if res is None else res.size * res.dtype.itemsize))
    ce = pl.CostEstimate(flops=2 * M * K * N, transcendentals=0,
                         bytes_accessed=bytes_accessed)

    in_specs = [pl.BlockSpec((bm, Kp), lambda i: (i, 0)),
                pl.BlockSpec((Kp, Np), lambda i: (0, 0)),
                pl.BlockSpec((1, Np), lambda i: (0, 0))]
    args = [xp, wp, bp]
    kernel = _linear_kernel
    if res is not None:
        in_specs.append(pl.BlockSpec((bm, Np), lambda i: (i, 0)))
        args.append(res.reshape(Mp, Np))
        kernel = _linear_res_kernel

    out = pl.pallas_call(
        kernel,
        out_shape=jax.ShapeDtypeStruct((Mp, Np), out_dtype),
        grid=(Mp // bm,),
        in_specs=in_specs,
        out_specs=pl.BlockSpec((bm, Np), lambda i: (i, 0)),
        compiler_params=pltpu.CompilerParams(dimension_semantics=("parallel",)),
        cost_estimate=ce,
    )(*args)
    return out.reshape(M, N)


# ---------------------------------------------------------------------------
# spatial transformer stack (encoder / reconstructor)
# ---------------------------------------------------------------------------

def _mhsa(q, k, v, num_heads, kv_tile):
    # q, k, v: (nb, T, C) bf16; q pre-scaled (1/sqrt(dh) folded into wq).
    # All heads batched on the leading axis: one einsum pair per KV tile.
    nb, T, C = q.shape
    H = num_heads
    dh = C // H

    def split(x):  # (nb, T, C) -> (nb*H, T, dh); head-major on axis 0
        return jnp.concatenate(
            [x[:, :, h * dh:(h + 1) * dh] for h in range(H)], axis=0)

    qh, kh, vh = split(q), split(k), split(v)
    n_tiles = T // kv_tile

    if n_tiles == 1:
        s = jnp.einsum('bqd,bkd->bqk', qh, kh,
                       preferred_element_type=jnp.float32)
        p = jnp.exp(s - s.max(-1, keepdims=True))
        acc = jnp.einsum('bqk,bkd->bqd', p.astype(jnp.bfloat16), vh,
                         preferred_element_type=jnp.float32)
        o = acc * pl.reciprocal(p.sum(-1, keepdims=True), approx=True)
    else:
        # streamed-KV online softmax with a single live (m, l, acc) carry
        def body(i, carry):
            m, l, acc = carry
            kt = jax.lax.dynamic_slice_in_dim(kh, i * kv_tile, kv_tile, axis=1)
            vt = jax.lax.dynamic_slice_in_dim(vh, i * kv_tile, kv_tile, axis=1)
            s = jnp.einsum('bqd,bkd->bqk', qh, kt,
                           preferred_element_type=jnp.float32)
            mn = jnp.maximum(m, s.max(-1, keepdims=True))
            a = jnp.exp(m - mn)
            p = jnp.exp(s - mn)
            l = a * l + p.sum(-1, keepdims=True)
            acc = a * acc + jnp.einsum('bqk,bkd->bqd', p.astype(jnp.bfloat16),
                                       vt, preferred_element_type=jnp.float32)
            return mn, l, acc

        m0 = jnp.full((nb * H, T, 1), -jnp.inf, jnp.float32)
        l0 = jnp.zeros((nb * H, T, 1), jnp.float32)
        a0 = jnp.zeros((nb * H, T, dh), jnp.float32)
        m, l, acc = jax.lax.fori_loop(0, n_tiles, body, (m0, l0, a0))
        o = acc * pl.reciprocal(l, approx=True)

    attn = jnp.concatenate([o[h * nb:(h + 1) * nb] for h in range(H)], axis=-1)
    return attn.reshape(nb * T, C)                                # (nb*T, C) f32


def _block_stack_kernel(x_ref, ln1g, ln1b, wq, wk, wv, wo, ln2g, ln2b,
                        w1, b1, w2, b2, o_ref, resid_ref, *, num_heads, kv_tile):
    # Pre-LN transformer blocks; grid = (seq_blocks, layers).  The residual
    # stream lives in an f32 VMEM scratch across the layer axis; the bf16
    # output block is only written at the last layer.
    layer = pl.program_id(1)
    nb, T, C = o_ref.shape

    @pl.when(layer == 0)
    def _():
        resid_ref[...] = x_ref[...].astype(jnp.float32)

    x = resid_ref[...].reshape(nb * T, C)

    # --- attention (separate lane-aligned Q/K/V matmuls; scale folded in wq) ---
    xn = _layernorm(x, ln1g[layer], ln1b[layer]).astype(jnp.bfloat16)
    q = jnp.dot(xn, wq[layer], preferred_element_type=jnp.float32).astype(jnp.bfloat16)
    k = jnp.dot(xn, wk[layer], preferred_element_type=jnp.float32).astype(jnp.bfloat16)
    v = jnp.dot(xn, wv[layer], preferred_element_type=jnp.float32).astype(jnp.bfloat16)
    attn = _mhsa(q.reshape(nb, T, C), k.reshape(nb, T, C), v.reshape(nb, T, C),
                 num_heads, kv_tile)
    x = x + jnp.dot(attn.astype(jnp.bfloat16), wo[layer],
                    preferred_element_type=jnp.float32)

    # --- ReLU FFN ---
    xn2 = _layernorm(x, ln2g[layer], ln2b[layer]).astype(jnp.bfloat16)
    h1 = jnp.maximum(
        jnp.dot(xn2, w1[layer], preferred_element_type=jnp.float32) + b1[layer],
        0.0)
    x = x + jnp.dot(h1.astype(jnp.bfloat16), w2[layer],
                    preferred_element_type=jnp.float32) + b2[layer]

    resid_ref[...] = x.reshape(nb, T, C)

    @pl.when(layer == pl.num_programs(1) - 1)
    def _():
        o_ref[...] = resid_ref[...].astype(o_ref.dtype)


def transformer_stack(x, p, num_heads):
    # x: (NB, T, C) bf16; p holds L stacked layers. One pallas_call per stack.
    NB, T, C = x.shape
    L = p["wq"].shape[0]
    dh = C // num_heads
    cap = _vmem_capacity_bytes()
    big = cap >= 96 * 1024 * 1024
    nbt = _pick_seq_block(NB, T, 2048 if big else 1024)
    kv_tile = _pick_kv_tile(T, 1024 if big else 512)

    # fold 1/sqrt(dh) into the Q projection weight (removes a per-layer VPU mul)
    wq = (p["wq"].astype(jnp.float32) * (dh ** -0.5)).astype(p["wq"].dtype)

    # TODO(synk): for very large L*C*ffn the full-L resident weight blocks
    # should fall back to per-layer blocks; fine at these sizes.
    def resident(arr):
        return pl.BlockSpec(arr.shape, lambda i, l, _nd=arr.ndim: (0,) * _nd)

    kernel = functools.partial(_block_stack_kernel,
                               num_heads=num_heads, kv_tile=kv_tile)
    return pl.pallas_call(
        kernel,
        out_shape=jax.ShapeDtypeStruct((NB, T, C), jnp.bfloat16),
        grid=(NB // nbt, L),
        in_specs=[
            pl.BlockSpec((nbt, T, C), lambda i, l: (i, 0, 0)),
            resident(p["ln1_g"]), resident(p["ln1_b"]),
            resident(wq), resident(p["wk"]), resident(p["wv"]), resident(p["wo"]),
            resident(p["ln2_g"]), resident(p["ln2_b"]),
            resident(p["w1"]), resident(p["b1"]),
            resident(p["w2"]), resident(p["b2"]),
        ],
        out_specs=pl.BlockSpec((nbt, T, C), lambda i, l: (i, 0, 0)),
        scratch_shapes=[pltpu.VMEM((nbt, T, C), jnp.float32)],
        compiler_params=pltpu.CompilerParams(
            dimension_semantics=("parallel", "arbitrary"),
            vmem_limit_bytes=_vmem_limit_bytes(cap)),
    )(x, p["ln1_g"], p["ln1_b"], wq, p["wk"], p["wv"], p["wo"],
      p["ln2_g"], p["ln2_b"], p["w1"], p["b1"], p["w2"], p["b2"])


# ---------------------------------------------------------------------------
# temporal fusion (center-frame-query cross-frame attention + FFN)
# ---------------------------------------------------------------------------

def _temporal_fusion_kernel(x_ref, wq, wk, wv, wo, g_ref, gt_ref,
                            lnqg, lnqb, ln2g, ln2b, w1, b1, w2, b2,
                            o_ref, *, num_heads, center):
    # x block: (1, N, tq, C) -> out block (1, tq, C).  Every spatial token
    # attends over the N frames at the same position; all heads at once via a
    # group-sum matmul (no per-head lane slices).
    _, N, tq, C = x_ref.shape
    H = num_heads

    xa = x_ref[0].astype(jnp.float32).reshape(N * tq, C)
    xn = _layernorm(xa, lnqg[...], lnqb[...])
    xnb = xn.astype(jnp.bfloat16)
    k = jnp.dot(xnb, wk[...], preferred_element_type=jnp.float32)   # (N*tq, C)
    v = jnp.dot(xnb, wv[...], preferred_element_type=jnp.float32)
    qn = xnb[center * tq:(center + 1) * tq]                          # LN'ed center
    q = jnp.dot(qn, wq[...], preferred_element_type=jnp.float32)     # (tq, C), scaled

    # logits[n, t, h] = sum_{d in head h} q[t, d] * k[n, t, d]
    prod = (q[None] * k.reshape(N, tq, C)).reshape(N * tq, C)
    logits = jnp.dot(prod, g_ref[...],
                     preferred_element_type=jnp.float32).reshape(N, tq, H)
    m = logits.max(axis=0, keepdims=True)
    e = jnp.exp(logits - m)
    p = e * pl.reciprocal(e.sum(axis=0, keepdims=True), approx=True)  # (N, tq, H)
    p_full = jnp.dot(p.reshape(N * tq, H), gt_ref[...],
                     preferred_element_type=jnp.float32)              # (N*tq, C)
    attn = (p_full * v).reshape(N, tq, C).sum(axis=0)                 # (tq, C)

    xc = x_ref[0, center].astype(jnp.float32)                         # (tq, C)
    y = xc + jnp.dot(attn.astype(jnp.bfloat16), wo[...],
                     preferred_element_type=jnp.float32)

    yn = _layernorm(y, ln2g[...], ln2b[...]).astype(jnp.bfloat16)
    h1 = jnp.maximum(
        jnp.dot(yn, w1[...], preferred_element_type=jnp.float32) + b1[...], 0.0)
    y = y + jnp.dot(h1.astype(jnp.bfloat16), w2[...],
                    preferred_element_type=jnp.float32) + b2[...]
    o_ref[0] = y.astype(o_ref.dtype)


def temporal_fusion(x, p, num_heads):
    B, N, T, C = x.shape
    dh = C // num_heads
    cap = _vmem_capacity_bytes()
    tq = _pick_tq(T, 512 if cap >= 96 * 1024 * 1024 else 256)

    wq = (p["wq"].astype(jnp.float32) * (dh ** -0.5)).astype(p["wq"].dtype)
    # per-head group-sum matrices (built outside the kernel)
    g = (jnp.arange(C)[:, None] // dh
         == jnp.arange(num_heads)[None, :]).astype(jnp.float32)       # (C, H)
    gt = jnp.transpose(g)                                             # (H, C)

    def resident(arr):
        return pl.BlockSpec(arr.shape, lambda b, t, _nd=arr.ndim: (0,) * _nd)

    kernel = functools.partial(_temporal_fusion_kernel,
                               num_heads=num_heads, center=N // 2)
    return pl.pallas_call(
        kernel,
        out_shape=jax.ShapeDtypeStruct((B, T, C), jnp.bfloat16),
        grid=(B, T // tq),
        in_specs=[
            pl.BlockSpec((1, N, tq, C), lambda b, t: (b, 0, t, 0)),
            resident(wq), resident(p["wk"]), resident(p["wv"]), resident(p["wo"]),
            resident(g), resident(gt),
            resident(p["lnq_g"]), resident(p["lnq_b"]),
            resident(p["ln2_g"]), resident(p["ln2_b"]),
            resident(p["w1"]), resident(p["b1"]),
            resident(p["w2"]), resident(p["b2"]),
        ],
        out_specs=pl.BlockSpec((1, tq, C), lambda b, t: (b, t, 0)),
        compiler_params=pltpu.CompilerParams(
            dimension_semantics=("parallel", "parallel"),
            vmem_limit_bytes=_vmem_limit_bytes(cap)),
    )(x, wq, p["wk"], p["wv"], p["wo"], g, gt,
      p["lnq_g"], p["lnq_b"], p["ln2_g"], p["ln2_b"],
      p["w1"], p["b1"], p["w2"], p["b2"])


# ---------------------------------------------------------------------------
# parameter initialization (deterministic, synthetic)
# ---------------------------------------------------------------------------

def _init_block_stack(key, L, C, ffn):
    ks = jax.random.split(key, 6)
    s = 0.05
    nrm = lambda k, shp: (s * jax.random.normal(k, shp, jnp.float32)).astype(jnp.bfloat16)
    return dict(
        ln1_g=jnp.ones((L, 1, C), jnp.float32),
        ln1_b=jnp.zeros((L, 1, C), jnp.float32),
        wq=nrm(ks[0], (L, C, C)), wk=nrm(ks[1], (L, C, C)),
        wv=nrm(ks[2], (L, C, C)), wo=nrm(ks[3], (L, C, C)),
        ln2_g=jnp.ones((L, 1, C), jnp.float32),
        ln2_b=jnp.zeros((L, 1, C), jnp.float32),
        w1=nrm(ks[4], (L, C, ffn)), b1=jnp.zeros((L, 1, ffn), jnp.float32),
        w2=nrm(ks[5], (L, ffn, C)), b2=jnp.zeros((L, 1, C), jnp.float32),
    )


def _init_temporal(key, C, ffn):
    ks = jax.random.split(key, 6)
    s = 0.05
    nrm = lambda k, shp: (s * jax.random.normal(k, shp, jnp.float32)).astype(jnp.bfloat16)
    return dict(
        wq=nrm(ks[0], (C, C)), wk=nrm(ks[1], (C, C)),
        wv=nrm(ks[2], (C, C)), wo=nrm(ks[3], (C, C)),
        lnq_g=jnp.ones((1, C), jnp.float32), lnq_b=jnp.zeros((1, C), jnp.float32),
        ln2_g=jnp.ones((1, C), jnp.float32), ln2_b=jnp.zeros((1, C), jnp.float32),
        w1=nrm(ks[4], (C, ffn)), b1=jnp.zeros((1, ffn), jnp.float32),
        w2=nrm(ks[5], (ffn, C)), b2=jnp.zeros((1, C), jnp.float32),
    )


def init_params(key, in_channels=3, inner_channels=32, ffn=64,
                num_layer_rec=2, patch_embedding_size=4):
    ks = jax.random.split(key, 8)
    s = 0.05
    nrmf = lambda k, shp: s * jax.random.normal(k, shp, jnp.float32)
    C = inner_channels
    pe = patch_embedding_size
    return dict(
        inner_channels=C,
        down_times=pe,
        # TODO(synk): exact Downsample definition unavailable; approximated as
        # non-overlapping pe x pe patch embedding (space-to-depth + linear).
        embed_w=nrmf(ks[0], (in_channels * pe * pe, C)).astype(jnp.bfloat16),
        embed_b=jnp.zeros((C,), jnp.float32),
        # TODO(synk): TransUnet definition unavailable; approximated by one
        # shape-preserving spatial transformer block per frame.
        enc=_init_block_stack(ks[1], 1, C, ffn),
        # TODO(synk): TemporalFusion definition unavailable; approximated by a
        # center-frame-query temporal cross-attention + FFN block.
        tf=_init_temporal(ks[2], C, ffn),
        # TODO(synk): EncoderBlock definition unavailable; reconstructor
        # approximated by a stack of spatial transformer blocks.
        rec=_init_block_stack(ks[3], num_layer_rec, C, ffn),
        up1_w=nrmf(ks[4], (C, 4 * C)), up1_b=jnp.zeros((4 * C,), jnp.float32),
        up2_w=nrmf(ks[5], (C, 4 * C)), up2_b=jnp.zeros((4 * C,), jnp.float32),
        out_w=nrmf(ks[6], (C, 3)), out_b=jnp.zeros((3,), jnp.float32),
    )


# ---------------------------------------------------------------------------
# forward pass (glue in plain JAX, compute in Pallas kernels)
# ---------------------------------------------------------------------------

def _fuse_upsample_out(up1_w, up1_b, up2_w, up2_b, out_w, out_b):
    # Exact linear composition of
    #   Conv1x1(C->4C) -> PixelShuffle(2) -> Conv1x1(C->4C) -> PixelShuffle(2)
    #   -> Conv1x1(C->3)
    # as one (C, 4*4*3) per-quarter-res-token projection; output index order is
    # (s1, s2, o) with s1=i1*2+j1 (first shuffle), s2=i2*2+j2 (second shuffle).
    C = up1_w.shape[0]
    u1w = up1_w.reshape(C, C, 4)          # [d, c, s1]
    u1b = up1_b.reshape(C, 4)             # [c, s1]
    u2w = up2_w.reshape(C, C, 4)          # [c, p, s2]
    u2b = up2_b.reshape(C, 4)             # [p, s2]
    w2o = jnp.einsum('cpt,po->cto', u2w, out_w)            # [c, s2, o]
    b2o = jnp.einsum('pt,po->to', u2b, out_w) + out_b      # [s2, o]
    w_full = jnp.einsum('dcs,cto->dsto', u1w, w2o)         # [d, s1, s2, o]
    b_full = jnp.einsum('cs,cto->sto', u1b, w2o) + b2o[None]
    return w_full.reshape(C, 48), b_full.reshape(48)


def vdtr_forward(params, x, num_heads=4):
    assert x.ndim == 5, "Input tensor should be in 5 dims!"
    B, N, Cin, H_, W_ = x.shape
    # pad2divisible(x, 16)  (zeros on right/bottom)
    H = ((H_ + 15) // 16) * 16
    W = ((W_ + 15) // 16) * 16
    x_pad = jnp.pad(x, ((0, 0), (0, 0), (0, 0), (0, H - H_), (0, W - W_)))

    C = params["inner_channels"]
    down = params["down_times"]
    Hc, Wc = H // down, W // down
    T = Hc * Wc

    # img2feats: space-to-depth patchify (glue) + lane-dense packed projection
    xf = x_pad.reshape(B * N, Cin, Hc, down, Wc, down)
    patches = xf.transpose(0, 2, 4, 1, 3, 5).reshape(B * N * T, Cin * down * down)
    feats = packed_linear(patches.astype(jnp.bfloat16), params["embed_w"],
                          params["embed_b"], out_dtype=jnp.bfloat16)

    # feature_encoder (TransUnet approx): per-frame spatial transformer block
    tokens = transformer_stack(feats.reshape(B * N, T, C), params["enc"], num_heads)

    # temporal fusion: (B, N, T, C) -> (B, T, C), queried by the center frame
    fused = temporal_fusion(tokens.reshape(B, N, T, C), params["tf"], num_heads)

    # reconstructor: stack of transformer blocks in ONE pallas_call
    rec = transformer_stack(fused, params["rec"], num_heads)

    # upsample + out_proj + center-frame residual fused into one packed matmul
    w48, b48 = _fuse_upsample_out(params["up1_w"], params["up1_b"],
                                  params["up2_w"], params["up2_b"],
                                  params["out_w"], params["out_b"])
    xc = x_pad[:, N // 2]                                     # (B, 3, H, W)
    res = xc.reshape(B, Cin, Hc, 2, 2, Wc, 2, 2)              # b,o,h4,i1,i2,w4,j1,j2
    res = res.transpose(0, 2, 5, 3, 6, 4, 7, 1).reshape(B * T, 4 * 4 * Cin)
    out48 = packed_linear(rec.reshape(B * T, C), w48.astype(jnp.bfloat16), b48,
                          res=res, out_dtype=jnp.float32)
    out = out48.reshape(B, Hc, Wc, 2, 2, 2, 2, Cin)           # b,h4,w4,i1,j1,i2,j2,o
    out = out.transpose(0, 7, 1, 3, 5, 2, 4, 6).reshape(B, Cin, H, W)

    # crop padding back off
    return out[..., :H_, :W_]


# ---------------------------------------------------------------------------

if __name__ == "__main__":
    key = jax.random.PRNGKey(0)
    kp, kx = jax.random.split(key)

    # Small shapes: batch=1, frames=3, in_channels=3, spatial 12x12 (exercises
    # pad2divisible -> 16x16), inner_channels=32, ffn=64, heads=4.
    B, N, Cin, H_, W_ = 1, 3, 3, 12, 12
    x = jax.random.normal(kx, (B, N, Cin, H_, W_), dtype=jnp.float32)

    params = init_params(kp, in_channels=Cin, inner_channels=32, ffn=64,
                         num_layer_rec=2, patch_embedding_size=4)

    out = vdtr_forward(params, x, num_heads=4)
    out = jax.block_until_ready(out)
    assert out.shape == (B, Cin, H_, W_), out.shape
    assert bool(jnp.all(jnp.isfinite(out)))
    print("KERNEL_OK")
</pallas_src>

<mosaic_0001>
module attributes {stable_mosaic.version = 11 : i64} {
  func.func @_linear_kernel(%arg0: i32, %arg1: memref<12x192xbf16, #tpu.memory_space<vmem>>, %arg2: memref<192x128xbf16, #tpu.memory_space<vmem>>, %arg3: memref<1x128xf32, #tpu.memory_space<vmem>>, %arg4: memref<12x128xbf16, #tpu.memory_space<vmem>>) attributes {dimension_semantics = [#tpu.dimension_semantics<parallel>], iteration_bounds = array<i64: 1>, scalar_prefetch = 0 : i64, scratch_operands = 0 : i64, tpu.core_type = #tpu.core_type<tc>, window_params = [{transform_indices = @transform_0, window_bounds = array<i64: 12, 192>}, {pipeline_mode = #tpu.pipeline_mode<synchronous>, transform_indices = @transform_1, window_bounds = array<i64: 192, 128>}, {pipeline_mode = #tpu.pipeline_mode<synchronous>, transform_indices = @transform_2, window_bounds = array<i64: 1, 128>}, {transform_indices = @transform_3, window_bounds = array<i64: 12, 128>}]} {
    %c0 = arith.constant 0 : index
    %c0_0 = arith.constant 0 : index
    %0 = vector.load %arg1[%c0, %c0_0] : memref<12x192xbf16, #tpu.memory_space<vmem>>, vector<12x192xbf16>
    %c0_1 = arith.constant 0 : index
    %c0_2 = arith.constant 0 : index
    %1 = vector.load %arg2[%c0_1, %c0_2] : memref<192x128xbf16, #tpu.memory_space<vmem>>, vector<192x128xbf16>
    %cst = arith.constant dense<0.000000e+00> : vector<12x128xf32>
    %2 = tpu.matmul %0, %1, %cst {dimension_numbers = #tpu.dot_dimension_numbers<[1], [0], [0], [1], [0, 0, 1, 1], [], []>} : vector<12x192xbf16>, vector<192x128xbf16>, vector<12x128xf32> -> vector<12x128xf32>
    %c0_3 = arith.constant 0 : index
    %c0_4 = arith.constant 0 : index
    %3 = vector.load %arg3[%c0_3, %c0_4] : memref<1x128xf32, #tpu.memory_space<vmem>>, vector<1x128xf32>
    %4 = vector.broadcast %3 : vector<1x128xf32> to vector<12x128xf32>
    %5 = arith.addf %2, %4 : vector<12x128xf32>
    %6 = arith.truncf %5 : vector<12x128xf32> to vector<12x128xbf16>
    %c0_5 = arith.constant 0 : index
    %c0_6 = arith.constant 0 : index
    %7 = vector.load %arg4[%c0_5, %c0_6] : memref<12x128xbf16, #tpu.memory_space<vmem>>, vector<12x128xbf16>
    tpu.vector_store %arg4[%c0_5, %c0_6], %6 {strides = array<i32>} : memref<12x128xbf16, #tpu.memory_space<vmem>>, vector<12x128xbf16>,
    return
  }
  func.func @transform_0(%arg0: i32) -> (i32, i32) {
    %c0_i32 = arith.constant 0 : i32
    %c0_i32_0 = arith.constant 0 : i32
    return %arg0, %c0_i32 : i32, i32
  }
  func.func @transform_1(%arg0: i32) -> (i32, i32) {
    %c0_i32 = arith.constant 0 : i32
    %c0_i32_0 = arith.constant 0 : i32
    %c0_i32_1 = arith.constant 0 : i32
    return %c0_i32, %c0_i32_0 : i32, i32
  }
  func.func @transform_2(%arg0: i32) -> (i32, i32) {
    %c0_i32 = arith.constant 0 : i32
    %c0_i32_0 = arith.constant 0 : i32
    %c0_i32_1 = arith.constant 0 : i32
    return %c0_i32, %c0_i32_0 : i32, i32
  }
  func.func @transform_3(%arg0: i32) -> (i32, i32) {
    %c0_i32 = arith.constant 0 : i32
    %c0_i32_0 = arith.constant 0 : i32
    return %arg0, %c0_i32 : i32, i32
  }
}

</mosaic_0001>

<llo_original>
// kernel: tpu_custom_call.1
$region0: #{tpu_custom_call.1}
  #allocation0 [shape = 'u32[]', space=smem, size = 0x4, offset = 0x4, fixed_abs, tag = 'smem constant byte address 0x4 - core index']
  #allocation1 [shape = 'u32[144,128]{1,0:T(1,128)}', space=vmem, size = 0x12000, scoped, tag = 'internal scratch']
  %s0 = inlined_call_operand.hbm [shape: bf16[12,192], index: 0, kind: input, shape index: {}]
  %s1 = inlined_call_operand.hbm [shape: bf16[192,128], index: 1, kind: input, shape index: {}]
  %s2 = inlined_call_operand.vmem [shape: f32[1,128], index: 2, kind: input, shape index: {}]
  %s3 = inlined_call_operand.hbm [shape: bf16[12,128], index: 3, kind: output, shape index: {}]
  %s4 = sld [smem:[#allocation0]]
  $region30: #{tpu_custom_call.1} parent=0
    _
  %s6 = ssub.s32 1, %s4
  %s7 = scalar_select 0, %s6, %s4
  $region1: #{tpu_custom_call.1} parent=0
    #allocation2 [shape = 'u8[8192]{0}', space=vmem, size = 0x2000, scoped, tag = 'input window, operand 0, single buffered']
    #allocation3 [shape = 's32[1]{0}', space=sflag, size = 0x4, scoped, tag = 'scoped memory for tpu_custom_call.1']
    #allocation4 [shape = 's32[1]{0}', space=sflag, size = 0x4, scoped, tag = 'scoped memory for tpu_custom_call.1']
    #allocation5 [shape = 'u8[49152]{0}', space=vmem, size = 0xc000, scoped, tag = 'input window, operand 1, single buffered']
    #allocation6 [shape = 's32[1]{0}', space=sflag, size = 0x4, scoped, tag = 'scoped memory for tpu_custom_call.1']
    #allocation7 [shape = 'u8[4096]{0}', space=vmem, size = 0x1000, scoped, tag = 'output window, operand 0, single buffered']
    %8 = vsyncpa [#allocation3], 0
    %9 = vsyncpa [#allocation6], 0
    %10 = vsyncpa [#allocation4], 0
    // Predicated region
    $region2: #{tpu_custom_call.1} parent=1 // pred_check
      _
    $region3: #{tpu_custom_call.1} parent=1 // pred_check_branch
      %12 = sbr.rel (0) target = $region5
    $region4: #{tpu_custom_call.1} parent=1 // pred_region
      %s14 = ssub.s32 256, 256
      %15 = vsyncadd [#allocation3], %s14
      %s16 = sshll.u32 [#allocation2], 4
      %s17 = int_to_ptr.vmem [resolvable:$true] %s16
      %22 = dma.hbm_to_vmem [thread:$0]  %s0, 256, %s17, [#allocation3], 128, 128, 8
    $region5: #{tpu_custom_call.1} parent=1 // pred_fallthru
      _
    // Predicated region
    $region6: #{tpu_custom_call.1} parent=1 // pred_check
      _
    $region7: #{tpu_custom_call.1} parent=1 // pred_check_branch
      %24 = sbr.rel (0) target = $region9
    $region8: #{tpu_custom_call.1} parent=1 // pred_region
      %s26 = ssub.s32 1536, 1536
      %27 = vsyncadd [#allocation6], %s26
      %s28 = sshll.u32 [#allocation5], 4
      %s29 = int_to_ptr.vmem [resolvable:$true] %s28
      %34 = dma.hbm_to_vmem [thread:$0]  %s1, 1536, %s29, [#allocation6], 64, 64, 4
    $region9: #{tpu_custom_call.1} parent=1 // pred_fallthru
      _
    // Predicated region
    $region10: #{tpu_custom_call.1} parent=1 // pred_check
      _
    $region11: #{tpu_custom_call.1} parent=1 // pred_check_branch
      %36 = sbr.rel (0) target = $region13
    $region12: #{tpu_custom_call.1} parent=1 // pred_region
      _
    $region13: #{tpu_custom_call.1} parent=1 // pred_fallthru
      _
    // Predicated region
    $region14: #{tpu_custom_call.1} parent=1 // pred_check
      _
    $region15: #{tpu_custom_call.1} parent=1 // pred_check_branch
      %38 = sbr.rel (0) target = $region17
    $region16: #{tpu_custom_call.1} parent=1 // pred_region
      %39 = dma.done [#allocation3], 256
    $region17: #{tpu_custom_call.1} parent=1 // pred_fallthru
      _
    // Predicated region
    $region18: #{tpu_custom_call.1} parent=1 // pred_check
      _
    $region19: #{tpu_custom_call.1} parent=1 // pred_check_branch
      %41 = sbr.rel (0) target = $region21
    $region20: #{tpu_custom_call.1} parent=1 // pred_region
      %42 = dma.done [#allocation6], 1536
    $region21: #{tpu_custom_call.1} parent=1 // pred_fallthru
      _
    %v44 = vld [vmem:[#allocation2] sm:$0xff]
    %v45 = vld [vmem:[#allocation2 + $0x8] sm:$0x33]
    %v46 = vld [vmem:[#allocation5] sm:$0xf]
    %v47 = vld [vmem:[#allocation5 + $0x4] sm:$0xf]
    %v48 = vld [vmem:[#allocation5 + $0x8] sm:$0xf]
    %v49 = vld [vmem:[#allocation5 + $0xc] sm:$0xf]
    %v50 = vld [vmem:[#allocation5 + $0x10] sm:$0xf]
    %v51 = vld [vmem:[#allocation5 + $0x14] sm:$0xf]
    %v52 = vld [vmem:[#allocation5 + $0x18] sm:$0xf]
    %v53 = vld [vmem:[#allocation5 + $0x1c] sm:$0xf]
    %v54 = vld [vmem:[#allocation5 + $0x20] sm:$0xf]
    %v55 = vld [vmem:[#allocation5 + $0x24] sm:$0xf]
    %v56 = vld [vmem:[#allocation5 + $0x28] sm:$0xf]
    %v57 = vld [vmem:[#allocation5 + $0x2c] sm:$0xf]
    %v58 = vld [vmem:[#allocation5 + $0x30] sm:$0xf]
    %v59 = vld [vmem:[#allocation5 + $0x34] sm:$0xf]
    %v60 = vld [vmem:[#allocation5 + $0x38] sm:$0xf]
    %v61 = vld [vmem:[#allocation5 + $0x3c] sm:$0xf]
    %v62 = vld [vmem:[#allocation5 + $0x40] sm:$0xf]
    %v63 = vld [vmem:[#allocation5 + $0x44] sm:$0xf]
    %v64 = vld [vmem:[#allocation5 + $0x48] sm:$0xf]
    %v65 = vld [vmem:[#allocation5 + $0x4c] sm:$0xf]
    %v66 = vld [vmem:[#allocation5 + $0x50] sm:$0xf]
    %v67 = vld [vmem:[#allocation5 + $0x54] sm:$0xf]
    %v68 = vld [vmem:[#allocation5 + $0x58] sm:$0xf]
    %v69 = vld [vmem:[#allocation5 + $0x5c] sm:$0xf]
    %v70 = vld [vmem:[%s2] sm:$0x1]
    %v72 = vlaneseq
    %v73 = vshrl.u32 %v72, 7
    %v74 = vsub.s32 0, %v73
    %v75 = vrot.slane %v70, %v74
    %v79 = vunpack.c.l.b16 %v44
    %v80 = vunpack.c.h.b16 %v44
    %v81 = vunpack.c.l.b16 %v45
    %v82 = vunpack.c.h.b16 %v45
    %v83 = vpack.c.b16 %v81, %v79
    %v84 = vpack.c.b16 %v82, %v80
    %v110 = vunpack.c.l.b16 %v46
    %v111 = vunpack.c.l.b16 %v47
    %v112 = vunpack.c.l.b16 %v48
    %v113 = vunpack.c.l.b16 %v49
    %v114 = vunpack.c.l.b16 %v50
    %v115 = vunpack.c.l.b16 %v51
    %v116 = vunpack.c.l.b16 %v52
    %v117 = vunpack.c.l.b16 %v53
    %v118 = vunpack.c.l.b16 %v54
    %v119 = vunpack.c.l.b16 %v55
    %v120 = vunpack.c.l.b16 %v56
    %v121 = vunpack.c.l.b16 %v57
    %v122 = vunpack.c.l.b16 %v58
    %v123 = vunpack.c.l.b16 %v59
    %v124 = vunpack.c.l.b16 %v60
    %v125 = vunpack.c.l.b16 %v61
    %v126 = vunpack.c.l.b16 %v62
    %v127 = vunpack.c.l.b16 %v63
    %v128 = vunpack.c.l.b16 %v64
    %v129 = vunpack.c.l.b16 %v65
    %v130 = vunpack.c.l.b16 %v66
    %v131 = vunpack.c.l.b16 %v67
    %v132 = vunpack.c.l.b16 %v68
    %v133 = vunpack.c.l.b16 %v69
    %v134 = vpack.c.b16 %v111, %v110
    %v135 = vpack.c.b16 %v113, %v112
    %v136 = vpack.c.b16 %v115, %v114
    %v137 = vpack.c.b16 %v117, %v116
    %v138 = vpack.c.b16 %v119, %v118
    %v139 = vpack.c.b16 %v121, %v120
    %v140 = vpack.c.b16 %v123, %v122
    %v141 = vpack.c.b16 %v125, %v124
    %v142 = vpack.c.b16 %v127, %v126
    %v143 = vpack.c.b16 %v129, %v128
    %v144 = vpack.c.b16 %v131, %v130
    %v145 = vpack.c.b16 %v133, %v132
    %vm158 = vcmask 523264
    %v160 = vsel %vm158, %v84, 0
    %162 = vmatprep.subr.bf16.mxu0 0
    %163 = vmatpush1.bf16.msra.mxu0 %v134
    %164 = vmatprep.subr.bf16.mxu0 0
    %165 = vmatpush1.bf16.msra.mxu0 %v135
    %166 = vmatprep.subr.bf16.mxu0 0
    %167 = vmatpush1.bf16.msra.mxu0 %v136
    %168 = vmatprep.subr.bf16.mxu0 0
    %169 = vmatpush1.bf16.msra.mxu0 %v137
    %170 = vmatprep.subr.bf16.mxu0 0
    %171 = vmatpush1.bf16.msra.mxu0 %v138
    %172 = vmatprep.subr.bf16.mxu0 0
    %173 = vmatpush1.bf16.msra.mxu0 %v139
    %174 = vmatprep.subr.bf16.mxu0 0
    %175 = vmatpush1.bf16.msra.mxu0 %v140
    %176 = vmatprep.subr.bf16.mxu0 0
    %177 = vmatpush1.bf16.msra.mxu0 %v141
    %178 = vmatprep.subr.bf16.mxu0 0
    %179 = vmatpush1.bf16.msra.mxu0 %v142
    %180 = vmatprep.subr.bf16.mxu0 0
    %181 = vmatpush1.bf16.msra.mxu0 %v143
    %182 = vmatprep.subr.bf16.mxu0 0
    %183 = vmatpush1.bf16.msra.mxu0 %v144
    %184 = vmatprep.subr.bf16.mxu0 0
    %185 = vmatpush1.bf16.msra.mxu0 %v145
    %186 = vmatprep.subr.bf16.mxu0 0
    %187 = vmatpush1.bf16.msra.mxu0 0
    %188 = vmatprep.subr.bf16.mxu0 0
    %189 = vmatpush1.bf16.msra.mxu0 0
    %190 = vmatprep.subr.bf16.mxu0 0
    %191 = vmatpush1.bf16.msra.mxu0 0
    %192 = vmatprep.subr.bf16.mxu0 0
    %193 = vmatpush1.bf16.msra.mxu0 0
    %194 = vmatprep.mubr.bf16.mxu0 %v160
    %195 = vmatmul.mubr.bf16.gmra.mrb[0].mxu0 %v83
    %v196 = vpop.f32.mrb[0].mxu0
    %v197 = vadd.f32 %v75, %v196
    %v198 = vpop.f32.mrb[0].mxu0
    %v199 = vpop.f32.mrb[0].mxu0
    %v200 = vadd.f32 %v75, %v199
    %v201 = vpop.f32.mrb[0].mxu0
    %202 = vdwg.mxu0
    %v203 = vpack.c.bf16 %v200, %v197
    %v205 = vunpack.c.l.b16 %v203
    %v206 = vunpack.c.h.b16 %v203
    %v207 = vpack.c.b16 %v205, %v205
    %v208 = vpack.c.b16 %v206, %v206
    %211 = vst [vmem:[#allocation7] sm:$0xf] %v207
    %212 = vst [vmem:[#allocation7 + $0x4] sm:$0x3] %v208
    // Predicated region
    $region22: #{tpu_custom_call.1} parent=1 // pred_check
      _
    $region23: #{tpu_custom_call.1} parent=1 // pred_check_branch
      %214 = sbr.rel (0) target = $region25
    $region24: #{tpu_custom_call.1} parent=1 // pred_region
      %s216 = ssub.s32 128, 128
      %217 = vsyncadd [#allocation4], %s216
      %s218 = sshll.u32 [#allocation7], 4
      %s219 = int_to_ptr.vmem [resolvable:$true] %s218
      %224 = dma.vmem_to_hbm [thread:$0]  %s219, 128, %s3, [#allocation4], 64, 64, 4
    $region25: #{tpu_custom_call.1} parent=1 // pred_fallthru
      _
    // Predicated region
    $region26: #{tpu_custom_call.1} parent=1 // pred_check
      _
    $region27: #{tpu_custom_call.1} parent=1 // pred_check_branch
      %226 = sbr.rel (0) target = $region29
    $region28: #{tpu_custom_call.1} parent=1 // pred_region
      %227 = dma.done [#allocation4], 128
    $region29: #{tpu_custom_call.1} parent=1 // pred_fallthru
      _
    %228 = vsyncpa [#allocation3], 1
    %229 = vsyncpa [#allocation6], 1
    %230 = vsyncpa [#allocation4], 1

</llo_original>
